<compile_context>
chip_gen: v7x
topology: tpu7x:2x2x1
jax: 0.10.0
libtpu: 0.0.40
codegen_flags: <defaults>
</compile_context>

<pallas_src>
import functools
import math

import jax
import jax.numpy as jnp
from jax.experimental import pallas as pl
from jax.experimental.pallas import tpu as pltpu


def _round_up(x, m):
    return (x + m - 1) // m * m


def _cdiv(a, b):
    return -(-a // b)


# ---------------------------------------------------------------------------
# Kernels
# ---------------------------------------------------------------------------

def _fused_kernel(t_ref, x_ref, w_ref, b_ref, o_ref):
    """Weight-resident tile: o = (x @ w + b) / T.  No K axis, no scratch."""
    inv_t = 1.0 / t_ref[0, 0]
    acc = jnp.dot(x_ref[...], w_ref[...], preferred_element_type=jnp.float32)
    o_ref[...] = (acc + b_ref[...]) * inv_t


def _kred_kernel(t_ref, x_ref, w_ref, b_ref, o_ref):
    """K-reduction variant: accumulate directly into the resident f32 output tile."""
    kk = pl.program_id(2)

    @pl.when(kk == 0)
    def _():
        o_ref[...] = jnp.zeros_like(o_ref)

    o_ref[...] += jnp.dot(
        x_ref[...], w_ref[...], preferred_element_type=jnp.float32
    )

    @pl.when(kk == pl.num_programs(2) - 1)
    def _():
        inv_t = 1.0 / t_ref[0, 0]
        o_ref[...] = (o_ref[...] + b_ref[...]) * inv_t


# ---------------------------------------------------------------------------
# Parameter prep (one-time, hoisted out of the hot path)
# ---------------------------------------------------------------------------

def prepare_linear_params(weight, bias):
    """weight: [NC, K]  ->  w_p bf16 [K_pad, NC_pad];  bias: [NC] -> b_p f32 [1, NC_pad].

    Pads only to the (8, 128) lane grid (multiples of 128).  Tile sizes are
    derived from w_p.shape at call time, so there is no coupling to tile
    constants in this file.
    """
    nc, k = weight.shape
    k_pad = _round_up(k, 128)
    nc_pad = _round_up(nc, 128)
    w_p = (
        jnp.zeros((k_pad, nc_pad), jnp.bfloat16)
        .at[:k, :nc]
        .set(weight.T.astype(jnp.bfloat16))
    )
    b_p = jnp.zeros((1, nc_pad), jnp.float32).at[0, :nc].set(
        bias.astype(jnp.float32)
    )
    return w_p, b_p


# ---------------------------------------------------------------------------
# Forward wrapper
# ---------------------------------------------------------------------------

_VMEM_LIMIT = 32 * 1024 * 1024   # explicit scoped-VMEM limit (safe on v5e/v6e/v7x)
_VMEM_BUDGET = 20 * 1024 * 1024  # residence check, with headroom for compiler scratch
_TM_MAX = 512
_TK_MAX = 1024


def _pick_tile(dim_pad, cap):
    """Largest 128-multiple divisor of dim_pad that is <= cap (>= 128)."""
    units = dim_pad // 128
    best = 1
    for d in range(1, units + 1):
        if units % d == 0 and d * 128 <= cap:
            best = d
    return best * 128


@functools.partial(jax.jit, static_argnames=("num_classes", "force_tk"))
def model_with_temperature_forward(
    x_nchw, w_p, b_p, temperature, *, num_classes, force_tk=None
):
    """Pallas-fused forward of ModelWithTemperature around a linear classifier.

    x_nchw:      [N, C, H, W] float32
    w_p:         [K_pad, NC_pad] bf16 pre-transposed/padded weight (prepare_linear_params)
    b_p:         [1, NC_pad] f32 pre-padded bias
    temperature: python float or scalar array
    returns:     [N, num_classes] float32 == (x_flat @ W.T + b) / temperature
    """
    n = x_nchw.shape[0]
    k = math.prod(x_nchw.shape[1:])
    k_pad, nc_pad = w_p.shape

    # Activations as bf16 for the MXU / HBM streams (accumulation stays f32).
    x2d = x_nchw.reshape(n, k).astype(jnp.bfloat16)

    # K must be zero-padded (garbage columns would corrupt the reduction).
    # M stays ragged: Pallas masks the overhang rows, which are discarded anyway.
    if k_pad != k:
        x2d = jnp.pad(x2d, ((0, 0), (0, k_pad - k)))

    # --- tile selection ----------------------------------------------------
    # Class tile: whole padded class dim when modest, so x is read from HBM once.
    if nc_pad <= 512:
        tn = nc_pad
    else:
        tn = 256 if nc_pad % 256 == 0 else 128
    n_tiles = nc_pad // tn

    # M tile (ragged last block allowed).
    tm = min(_TM_MAX, _round_up(n, 8))
    # v7x megacore: ensure >= 2 tiles on a parallel axis when the batch allows.
    if n >= 16 and _cdiv(n, tm) * n_tiles < 2:
        tm = _round_up(_cdiv(n, 2), 8)
    m_tiles = _cdiv(n, tm)

    # K tile: collapse the reduction axis entirely when the double-buffered
    # tiles fit the VMEM budget, otherwise pick a 128-multiple divisor of K_pad.
    def vmem_bytes(tk_):
        return (
            2 * tm * tk_ * 2      # x   (bf16, double buffered)
            + 2 * tk_ * tn * 2    # w   (bf16, double buffered)
            + 2 * tm * tn * 4     # out (f32, double buffered)
            + 2 * tn * 4          # bias
        )

    if force_tk is not None:
        tk = force_tk
    elif vmem_bytes(k_pad) <= _VMEM_BUDGET:
        tk = k_pad
    else:
        tk = _pick_tile(k_pad, _TK_MAX)
        while tk > 128 and vmem_bytes(tk) > _VMEM_BUDGET:
            tk = _pick_tile(k_pad, tk - 128)
    k_tiles = k_pad // tk

    t_arr = jnp.asarray(temperature, jnp.float32).reshape(1, 1)

    cost = pl.CostEstimate(
        flops=2 * n * k_pad * nc_pad,
        transcendentals=0,
        bytes_accessed=2 * (n * k_pad + k_pad * nc_pad) + 4 * (nc_pad + n * nc_pad),
    )

    if k_tiles == 1:
        # Grid (M, NC); class axis innermost so the x block (depends only on i)
        # is never re-fetched across class tiles.
        out = pl.pallas_call(
            _fused_kernel,
            out_shape=jax.ShapeDtypeStruct((n, nc_pad), jnp.float32),
            grid=(m_tiles, n_tiles),
            in_specs=[
                pl.BlockSpec(memory_space=pltpu.MemorySpace.SMEM),   # temperature
                pl.BlockSpec((tm, k_pad), lambda i, j: (i, 0)),      # x strip
                pl.BlockSpec((k_pad, tn), lambda i, j: (0, j)),      # resident weight
                pl.BlockSpec((1, tn), lambda i, j: (0, j)),          # bias
            ],
            out_specs=pl.BlockSpec((tm, tn), lambda i, j: (i, j)),
            compiler_params=pltpu.CompilerParams(
                dimension_semantics=("parallel", "parallel"),
                vmem_limit_bytes=_VMEM_LIMIT,
            ),
            cost_estimate=cost,
        )(t_arr, x2d, w_p, b_p)
    else:
        # Grid (M, NC, K); K is the last ("arbitrary") axis, output tile resident.
        out = pl.pallas_call(
            _kred_kernel,
            out_shape=jax.ShapeDtypeStruct((n, nc_pad), jnp.float32),
            grid=(m_tiles, n_tiles, k_tiles),
            in_specs=[
                pl.BlockSpec(memory_space=pltpu.MemorySpace.SMEM),       # temperature
                pl.BlockSpec((tm, tk), lambda i, j, kk: (i, kk)),        # x tile
                pl.BlockSpec((tk, tn), lambda i, j, kk: (kk, j)),        # w tile
                pl.BlockSpec((1, tn), lambda i, j, kk: (0, j)),          # bias
            ],
            out_specs=pl.BlockSpec((tm, tn), lambda i, j, kk: (i, j)),
            compiler_params=pltpu.CompilerParams(
                dimension_semantics=("parallel", "parallel", "arbitrary"),
                vmem_limit_bytes=_VMEM_LIMIT,
            ),
            cost_estimate=cost,
        )(t_arr, x2d, w_p, b_p)

    return out[:, :num_classes]


if __name__ == "__main__":
    # Small deterministic example consistent with an NCHW classifier input.
    N, C, H, W = 2, 4, 16, 16          # K = 1024
    NUM_CLASSES = 10
    TEMPERATURE = 1.5                  # self.temperature (1.0 default; 1.5 to exercise scaling)

    key = jax.random.PRNGKey(0)
    kx, kw, kb = jax.random.split(key, 3)
    x = jax.random.normal(kx, (N, C, H, W), dtype=jnp.float32)
    weight = jax.random.normal(kw, (NUM_CLASSES, C * H * W), dtype=jnp.float32) * 0.02
    bias = jax.random.normal(kb, (NUM_CLASSES,), dtype=jnp.float32) * 0.1

    # One-time parameter prep (hoisted out of the hot path).
    w_p, b_p = prepare_linear_params(weight, bias)
    w_p, b_p = jax.block_until_ready((w_p, b_p))

    # Reference with the same bf16 input rounding, f32 accumulation.
    x_flat = x.reshape(N, -1)
    ref = (
        jnp.dot(
            x_flat.astype(jnp.bfloat16),
            weight.T.astype(jnp.bfloat16),
            preferred_element_type=jnp.float32,
        )
        + bias
    ) / TEMPERATURE

    # Path A: weight-resident fused kernel (no K grid axis).
    out_a = model_with_temperature_forward(
        x, w_p, b_p, TEMPERATURE, num_classes=NUM_CLASSES
    )
    out_a = jax.block_until_ready(out_a)
    assert out_a.shape == (N, NUM_CLASSES)
    assert jnp.allclose(out_a, ref, atol=2e-2, rtol=2e-2), "fused path mismatch"

    # Path B: K-reduction kernel (forced tk=512 -> 2 K steps) for coverage.
    out_b = model_with_temperature_forward(
        x, w_p, b_p, TEMPERATURE, num_classes=NUM_CLASSES, force_tk=512
    )
    out_b = jax.block_until_ready(out_b)
    assert out_b.shape == (N, NUM_CLASSES)
    assert jnp.allclose(out_b, ref, atol=2e-2, rtol=2e-2), "k-reduction path mismatch"

    print("KERNEL_OK")
</pallas_src>

<mosaic_0001>
module attributes {stable_mosaic.version = 11 : i64} {
  func.func @_fused_kernel(%arg0: i32, %arg1: i32, %arg2: memref<1x1xf32, #tpu.memory_space<smem>>, %arg3: memref<8x1024xbf16, #tpu.memory_space<vmem>>, %arg4: memref<1024x128xbf16, #tpu.memory_space<vmem>>, %arg5: memref<1x128xf32, #tpu.memory_space<vmem>>, %arg6: memref<8x128xf32, #tpu.memory_space<vmem>>) attributes {dimension_semantics = [#tpu.dimension_semantics<parallel>, #tpu.dimension_semantics<parallel>], iteration_bounds = array<i64: 1, 1>, scalar_prefetch = 0 : i64, scratch_operands = 0 : i64, tpu.core_type = #tpu.core_type<tc>, window_params = [{transform_indices = @transform_0, window_bounds = array<i64: 1, 1>}, {transform_indices = @transform_1, window_bounds = array<i64: 8, 1024>}, {transform_indices = @transform_2, window_bounds = array<i64: 1024, 128>}, {transform_indices = @transform_3, window_bounds = array<i64: 1, 128>}, {transform_indices = @transform_4, window_bounds = array<i64: 8, 128>}]} {
    %c0 = arith.constant 0 : index
    %c0_0 = arith.constant 0 : index
    %0 = memref.load %arg2[%c0, %c0_0] : memref<1x1xf32, #tpu.memory_space<smem>>
    %cst = arith.constant 1.000000e+00 : f32
    %1 = arith.divf %cst, %0 : f32
    %c0_1 = arith.constant 0 : index
    %c0_2 = arith.constant 0 : index
    %2 = vector.load %arg3[%c0_1, %c0_2] : memref<8x1024xbf16, #tpu.memory_space<vmem>>, vector<8x1024xbf16>
    %c0_3 = arith.constant 0 : index
    %c0_4 = arith.constant 0 : index
    %3 = vector.load %arg4[%c0_3, %c0_4] : memref<1024x128xbf16, #tpu.memory_space<vmem>>, vector<1024x128xbf16>
    %cst_5 = arith.constant dense<0.000000e+00> : vector<8x128xf32>
    %4 = tpu.matmul %2, %3, %cst_5 {dimension_numbers = #tpu.dot_dimension_numbers<[1], [0], [0], [1], [0, 0, 1, 1], [], []>} : vector<8x1024xbf16>, vector<1024x128xbf16>, vector<8x128xf32> -> vector<8x128xf32>
    %c0_6 = arith.constant 0 : index
    %c0_7 = arith.constant 0 : index
    %5 = vector.load %arg5[%c0_6, %c0_7] : memref<1x128xf32, #tpu.memory_space<vmem>>, vector<1x128xf32>
    %6 = vector.broadcast %5 : vector<1x128xf32> to vector<8x128xf32>
    %7 = arith.addf %4, %6 : vector<8x128xf32>
    %8 = vector.broadcast %1 : f32 to vector<8x128xf32>
    %9 = arith.mulf %7, %8 : vector<8x128xf32>
    %c0_8 = arith.constant 0 : index
    %c0_9 = arith.constant 0 : index
    %10 = vector.load %arg6[%c0_8, %c0_9] : memref<8x128xf32, #tpu.memory_space<vmem>>, vector<8x128xf32>
    tpu.vector_store %arg6[%c0_8, %c0_9], %9 {strides = array<i32>} : memref<8x128xf32, #tpu.memory_space<vmem>>, vector<8x128xf32>,
    return
  }
  func.func @transform_0(%arg0: i32, %arg1: i32) -> (i32, i32) {
    %c0_i32 = arith.constant 0 : i32
    %c0_i32_0 = arith.constant 0 : i32
    %c0_i32_1 = arith.constant 0 : i32
    return %c0_i32, %c0_i32_0 : i32, i32
  }
  func.func @transform_1(%arg0: i32, %arg1: i32) -> (i32, i32) {
    %c0_i32 = arith.constant 0 : i32
    %c0_i32_0 = arith.constant 0 : i32
    return %arg0, %c0_i32 : i32, i32
  }
  func.func @transform_2(%arg0: i32, %arg1: i32) -> (i32, i32) {
    %c0_i32 = arith.constant 0 : i32
    %c0_i32_0 = arith.constant 0 : i32
    return %c0_i32, %arg1 : i32, i32
  }
  func.func @transform_3(%arg0: i32, %arg1: i32) -> (i32, i32) {
    %c0_i32 = arith.constant 0 : i32
    %c0_i32_0 = arith.constant 0 : i32
    return %c0_i32, %arg1 : i32, i32
  }
  func.func @transform_4(%arg0: i32, %arg1: i32) -> (i32, i32) {
    %c0_i32 = arith.constant 0 : i32
    return %arg0, %arg1 : i32, i32
  }
}

</mosaic_0001>

<llo_original>
// kernel: model_with_temperature_forward.1
$region0: #{model_with_temperature_forward.1}
  #allocation0 [shape = 'u32[]', space=smem, size = 0x4, offset = 0x4, fixed_abs, tag = 'smem constant byte address 0x4 - core index']
  #allocation1 [shape = 'u32[144,128]{1,0:T(1,128)}', space=vmem, size = 0x12000, scoped, tag = 'internal scratch']
  #allocation2 [shape = 'f32[1,1]{1,0:T(1,128)S(6)}', space=smem, size = 0x200, scoped, tag = 'scoped memory for model_with_temperature_forward.1']
  %s0 = inlined_call_operand.<no memory space> [shape: f32[1,1], index: 0, kind: input, shape index: {}]
  %s1 = inlined_call_operand.vmem [shape: bf16[2,1024], index: 1, kind: input, shape index: {}]
  %s2 = inlined_call_operand.hbm [shape: bf16[1024,128], index: 2, kind: input, shape index: {}]
  %s3 = inlined_call_operand.vmem [shape: f32[1,128], index: 3, kind: input, shape index: {}]
  %s4 = inlined_call_operand.hbm [shape: f32[2,128], index: 4, kind: output, shape index: {}]
  %s5 = sld [smem:[#allocation0]]
  $region30: #{model_with_temperature_forward.1} parent=0
    _
  %s7 = ssub.s32 1, %s5
  %s8 = scalar_select 0, %s7, %s5
  %9 = sst [smem:[#allocation2]] %s0
  $region1: #{model_with_temperature_forward.1} parent=0
    #allocation3 [shape = 'u8[262144]{0}', space=vmem, size = 0x40000, scoped, tag = 'input window, operand 2, single buffered']
    #allocation4 [shape = 's32[1]{0}', space=sflag, size = 0x4, scoped, tag = 'scoped memory for model_with_temperature_forward.1']
    #allocation5 [shape = 's32[1]{0}', space=sflag, size = 0x4, scoped, tag = 'scoped memory for model_with_temperature_forward.1']
    #allocation6 [shape = 'u8[4096]{0}', space=vmem, size = 0x1000, scoped, tag = 'output window, operand 0, single buffered']
    %10 = vsyncpa [#allocation4], 0
    %11 = vsyncpa [#allocation5], 0
    // Predicated region
    $region2: #{model_with_temperature_forward.1} parent=1 // pred_check
      _
    $region3: #{model_with_temperature_forward.1} parent=1 // pred_check_branch
      %13 = sbr.rel (0) target = $region5
    $region4: #{model_with_temperature_forward.1} parent=1 // pred_region
      _
    $region5: #{model_with_temperature_forward.1} parent=1 // pred_fallthru
      _
    // Predicated region
    $region6: #{model_with_temperature_forward.1} parent=1 // pred_check
      _
    $region7: #{model_with_temperature_forward.1} parent=1 // pred_check_branch
      %15 = sbr.rel (0) target = $region9
    $region8: #{model_with_temperature_forward.1} parent=1 // pred_region
      _
    $region9: #{model_with_temperature_forward.1} parent=1 // pred_fallthru
      _
    // Predicated region
    $region10: #{model_with_temperature_forward.1} parent=1 // pred_check
      _
    $region11: #{model_with_temperature_forward.1} parent=1 // pred_check_branch
      %17 = sbr.rel (0) target = $region13
    $region12: #{model_with_temperature_forward.1} parent=1 // pred_region
      %s19 = ssub.s32 8192, 8192
      %20 = vsyncadd [#allocation4], %s19
      %s21 = sshll.u32 [#allocation3], 4
      %s22 = int_to_ptr.vmem [resolvable:$true] %s21
      %27 = dma.hbm_to_vmem [thread:$0]  %s2, 8192, %s22, [#allocation4], 64, 64, 4
    $region13: #{model_with_temperature_forward.1} parent=1 // pred_fallthru
      _
    // Predicated region
    $region14: #{model_with_temperature_forward.1} parent=1 // pred_check
      _
    $region15: #{model_with_temperature_forward.1} parent=1 // pred_check_branch
      %29 = sbr.rel (0) target = $region17
    $region16: #{model_with_temperature_forward.1} parent=1 // pred_region
      _
    $region17: #{model_with_temperature_forward.1} parent=1 // pred_fallthru
      _
    // Predicated region
    $region18: #{model_with_temperature_forward.1} parent=1 // pred_check
      _
    $region19: #{model_with_temperature_forward.1} parent=1 // pred_check_branch
      %31 = sbr.rel (0) target = $region21
    $region20: #{model_with_temperature_forward.1} parent=1 // pred_region
      %32 = dma.done [#allocation4], 8192
    $region21: #{model_with_temperature_forward.1} parent=1 // pred_fallthru
      _
    %s34 = sld [smem:[#allocation2]]
    %v35 = vstv %s34
    %v36 = vrcp.pop %v35
    %s37 = vtos %v36
    %v38 = vld [vmem:[%s1] sm:$0xff]
    %v39 = vld [vmem:[%s1 + $0x8] sm:$0xff]
    %v40 = vld [vmem:[%s1 + $0x10] sm:$0xff]
    %v41 = vld [vmem:[%s1 + $0x18] sm:$0xff]
    %v42 = vld [vmem:[#allocation3] sm:$0xf]
    %v43 = vld [vmem:[#allocation3 + $0x4] sm:$0xf]
    %v44 = vld [vmem:[#allocation3 + $0x8] sm:$0xf]
    %v45 = vld [vmem:[#allocation3 + $0xc] sm:$0xf]
    %v46 = vld [vmem:[#allocation3 + $0x10] sm:$0xf]
    %v47 = vld [vmem:[#allocation3 + $0x14] sm:$0xf]
    %v48 = vld [vmem:[#allocation3 + $0x18] sm:$0xf]
    %v49 = vld [vmem:[#allocation3 + $0x1c] sm:$0xf]
    %v50 = vld [vmem:[#allocation3 + $0x20] sm:$0xf]
    %v51 = vld [vmem:[#allocation3 + $0x24] sm:$0xf]
    %v52 = vld [vmem:[#allocation3 + $0x28] sm:$0xf]
    %v53 = vld [vmem:[#allocation3 + $0x2c] sm:$0xf]
    %v54 = vld [vmem:[#allocation3 + $0x30] sm:$0xf]
    %v55 = vld [vmem:[#allocation3 + $0x34] sm:$0xf]
    %v56 = vld [vmem:[#allocation3 + $0x38] sm:$0xf]
    %v57 = vld [vmem:[#allocation3 + $0x3c] sm:$0xf]
    %v58 = vld [vmem:[#allocation3 + $0x40] sm:$0xf]
    %v59 = vld [vmem:[#allocation3 + $0x44] sm:$0xf]
    %v60 = vld [vmem:[#allocation3 + $0x48] sm:$0xf]
    %v61 = vld [vmem:[#allocation3 + $0x4c] sm:$0xf]
    %v62 = vld [vmem:[#allocation3 + $0x50] sm:$0xf]
    %v63 = vld [vmem:[#allocation3 + $0x54] sm:$0xf]
    %v64 = vld [vmem:[#allocation3 + $0x58] sm:$0xf]
    %v65 = vld [vmem:[#allocation3 + $0x5c] sm:$0xf]
    %v66 = vld [vmem:[#allocation3 + $0x60] sm:$0xf]
    %v67 = vld [vmem:[#allocation3 + $0x64] sm:$0xf]
    %v68 = vld [vmem:[#allocation3 + $0x68] sm:$0xf]
    %v69 = vld [vmem:[#allocation3 + $0x6c] sm:$0xf]
    %v70 = vld [vmem:[#allocation3 + $0x70] sm:$0xf]
    %v71 = vld [vmem:[#allocation3 + $0x74] sm:$0xf]
    %v72 = vld [vmem:[#allocation3 + $0x78] sm:$0xf]
    %v73 = vld [vmem:[#allocation3 + $0x7c] sm:$0xf]
    %v74 = vld [vmem:[#allocation3 + $0x80] sm:$0xf]
    %v75 = vld [vmem:[#allocation3 + $0x84] sm:$0xf]
    %v76 = vld [vmem:[#allocation3 + $0x88] sm:$0xf]
    %v77 = vld [vmem:[#allocation3 + $0x8c] sm:$0xf]
    %v78 = vld [vmem:[#allocation3 + $0x90] sm:$0xf]
    %v79 = vld [vmem:[#allocation3 + $0x94] sm:$0xf]
    %v80 = vld [vmem:[#allocation3 + $0x98] sm:$0xf]
    %v81 = vld [vmem:[#allocation3 + $0x9c] sm:$0xf]
    %v82 = vld [vmem:[#allocation3 + $0xa0] sm:$0xf]
    %v83 = vld [vmem:[#allocation3 + $0xa4] sm:$0xf]
    %v84 = vld [vmem:[#allocation3 + $0xa8] sm:$0xf]
    %v85 = vld [vmem:[#allocation3 + $0xac] sm:$0xf]
    %v86 = vld [vmem:[#allocation3 + $0xb0] sm:$0xf]
    %v87 = vld [vmem:[#allocation3 + $0xb4] sm:$0xf]
    %v88 = vld [vmem:[#allocation3 + $0xb8] sm:$0xf]
    %v89 = vld [vmem:[#allocation3 + $0xbc] sm:$0xf]
    %v90 = vld [vmem:[#allocation3 + $0xc0] sm:$0xf]
    %v91 = vld [vmem:[#allocation3 + $0xc4] sm:$0xf]
    %v92 = vld [vmem:[#allocation3 + $0xc8] sm:$0xf]
    %v93 = vld [vmem:[#allocation3 + $0xcc] sm:$0xf]
    %v94 = vld [vmem:[#allocation3 + $0xd0] sm:$0xf]
    %v95 = vld [vmem:[#allocation3 + $0xd4] sm:$0xf]
    %v96 = vld [vmem:[#allocation3 + $0xd8] sm:$0xf]
    %v97 = vld [vmem:[#allocation3 + $0xdc] sm:$0xf]
    %v98 = vld [vmem:[#allocation3 + $0xe0] sm:$0xf]
    %v99 = vld [vmem:[#allocation3 + $0xe4] sm:$0xf]
    %v100 = vld [vmem:[#allocation3 + $0xe8] sm:$0xf]
    %v101 = vld [vmem:[#allocation3 + $0xec] sm:$0xf]
    %v102 = vld [vmem:[#allocation3 + $0xf0] sm:$0xf]
    %v103 = vld [vmem:[#allocation3 + $0xf4] sm:$0xf]
    %v104 = vld [vmem:[#allocation3 + $0xf8] sm:$0xf]
    %v105 = vld [vmem:[#allocation3 + $0xfc] sm:$0xf]
    %v106 = vld [vmem:[#allocation3 + $0x100] sm:$0xf]
    %v107 = vld [vmem:[#allocation3 + $0x104] sm:$0xf]
    %v108 = vld [vmem:[#allocation3 + $0x108] sm:$0xf]
    %v109 = vld [vmem:[#allocation3 + $0x10c] sm:$0xf]
    %v110 = vld [vmem:[#allocation3 + $0x110] sm:$0xf]
    %v111 = vld [vmem:[#allocation3 + $0x114] sm:$0xf]
    %v112 = vld [vmem:[#allocation3 + $0x118] sm:$0xf]
    %v113 = vld [vmem:[#allocation3 + $0x11c] sm:$0xf]
    %v114 = vld [vmem:[#allocation3 + $0x120] sm:$0xf]
    %v115 = vld [vmem:[#allocation3 + $0x124] sm:$0xf]
    %v116 = vld [vmem:[#allocation3 + $0x128] sm:$0xf]
    %v117 = vld [vmem:[#allocation3 + $0x12c] sm:$0xf]
    %v118 = vld [vmem:[#allocation3 + $0x130] sm:$0xf]
    %v119 = vld [vmem:[#allocation3 + $0x134] sm:$0xf]
    %v120 = vld [vmem:[#allocation3 + $0x138] sm:$0xf]
    %v121 = vld [vmem:[#allocation3 + $0x13c] sm:$0xf]
    %v122 = vld [vmem:[#allocation3 + $0x140] sm:$0xf]
    %v123 = vld [vmem:[#allocation3 + $0x144] sm:$0xf]
    %v124 = vld [vmem:[#allocation3 + $0x148] sm:$0xf]
    %v125 = vld [vmem:[#allocation3 + $0x14c] sm:$0xf]
    %v126 = vld [vmem:[#allocation3 + $0x150] sm:$0xf]
    %v127 = vld [vmem:[#allocation3 + $0x154] sm:$0xf]
    %v128 = vld [vmem:[#allocation3 + $0x158] sm:$0xf]
    %v129 = vld [vmem:[#allocation3 + $0x15c] sm:$0xf]
    %v130 = vld [vmem:[#allocation3 + $0x160] sm:$0xf]
    %v131 = vld [vmem:[#allocation3 + $0x164] sm:$0xf]
    %v132 = vld [vmem:[#allocation3 + $0x168] sm:$0xf]
    %v133 = vld [vmem:[#allocation3 + $0x16c] sm:$0xf]
    %v134 = vld [vmem:[#allocation3 + $0x170] sm:$0xf]
    %v135 = vld [vmem:[#allocation3 + $0x174] sm:$0xf]
    %v136 = vld [vmem:[#allocation3 + $0x178] sm:$0xf]
    %v137 = vld [vmem:[#allocation3 + $0x17c] sm:$0xf]
    %v138 = vld [vmem:[#allocation3 + $0x180] sm:$0xf]
    %v139 = vld [vmem:[#allocation3 + $0x184] sm:$0xf]
    %v140 = vld [vmem:[#allocation3 + $0x188] sm:$0xf]
    %v141 = vld [vmem:[#allocation3 + $0x18c] sm:$0xf]
    %v142 = vld [vmem:[#allocation3 + $0x190] sm:$0xf]
    %v143 = vld [vmem:[#allocation3 + $0x194] sm:$0xf]
    %v144 = vld [vmem:[#allocation3 + $0x198] sm:$0xf]
    %v145 = vld [vmem:[#allocation3 + $0x19c] sm:$0xf]
    %v146 = vld [vmem:[#allocation3 + $0x1a0] sm:$0xf]
    %v147 = vld [vmem:[#allocation3 + $0x1a4] sm:$0xf]
    %v148 = vld [vmem:[#allocation3 + $0x1a8] sm:$0xf]
    %v149 = vld [vmem:[#allocation3 + $0x1ac] sm:$0xf]
    %v150 = vld [vmem:[#allocation3 + $0x1b0] sm:$0xf]
    %v151 = vld [vmem:[#allocation3 + $0x1b4] sm:$0xf]
    %v152 = vld [vmem:[#allocation3 + $0x1b8] sm:$0xf]
    %v153 = vld [vmem:[#allocation3 + $0x1bc] sm:$0xf]
    %v154 = vld [vmem:[#allocation3 + $0x1c0] sm:$0xf]
    %v155 = vld [vmem:[#allocation3 + $0x1c4] sm:$0xf]
    %v156 = vld [vmem:[#allocation3 + $0x1c8] sm:$0xf]
    %v157 = vld [vmem:[#allocation3 + $0x1cc] sm:$0xf]
    %v158 = vld [vmem:[#allocation3 + $0x1d0] sm:$0xf]
    %v159 = vld [vmem:[#allocation3 + $0x1d4] sm:$0xf]
    %v160 = vld [vmem:[#allocation3 + $0x1d8] sm:$0xf]
    %v161 = vld [vmem:[#allocation3 + $0x1dc] sm:$0xf]
    %v162 = vld [vmem:[#allocation3 + $0x1e0] sm:$0xf]
    %v163 = vld [vmem:[#allocation3 + $0x1e4] sm:$0xf]
    %v164 = vld [vmem:[#allocation3 + $0x1e8] sm:$0xf]
    %v165 = vld [vmem:[#allocation3 + $0x1ec] sm:$0xf]
    %v166 = vld [vmem:[#allocation3 + $0x1f0] sm:$0xf]
    %v167 = vld [vmem:[#allocation3 + $0x1f4] sm:$0xf]
    %v168 = vld [vmem:[#allocation3 + $0x1f8] sm:$0xf]
    %v169 = vld [vmem:[#allocation3 + $0x1fc] sm:$0xf]
    %v170 = vld [vmem:[%s3] sm:$0x1]
    %v172 = vlaneseq
    %v173 = vshrl.u32 %v172, 7
    %v174 = vsub.s32 0, %v173
    %v175 = vrot.slane %v170, %v174
    %v181 = vcombine.low %v38, %v39
    %v182 = vcombine.high %v38, %v39
    %v183 = vcombine.low %v40, %v41
    %v184 = vcombine.high %v40, %v41
    %v186 = vunpack.c.l.s4 1966171168
    %v187 = vunpack.c.0.s8 %v186
    %v188 = vlaneseq
    %v189 = vshrl.u32 %v188, 7
    %v190 = vsub.s32 %v187, %v189
    %v191 = vrot.slane %v181, %v190
    %v193 = vunpack.c.l.s4 1966171168
    %v194 = vunpack.c.0.s8 %v193
    %v195 = vlaneseq
    %v196 = vshrl.u32 %v195, 7
    %v197 = vsub.s32 %v194, %v196
    %v198 = vrot.slane %v182, %v197
    %v200 = vunpack.c.l.s4 1966171168
    %v201 = vunpack.c.0.s8 %v200
    %v202 = vlaneseq
    %v203 = vshrl.u32 %v202, 7
    %v204 = vsub.s32 %v201, %v203
    %v205 = vrot.slane %v183, %v204
    %v207 = vunpack.c.l.s4 1966171168
    %v208 = vunpack.c.0.s8 %v207
    %v209 = vlaneseq
    %v210 = vshrl.u32 %v209, 7
    %v211 = vsub.s32 %v208, %v210
    %v212 = vrot.slane %v184, %v211
    %v213 = vcombine.low %v191, %v205
    %v214 = vcombine.high %v191, %v205
    %v215 = vcombine.low %v198, %v212
    %v216 = vcombine.high %v198, %v212
    %v218 = vunpack.c.l.s4 1966171168
    %v219 = vunpack.c.0.s8 %v218
    %v220 = vlaneseq
    %v221 = vshrl.u32 %v220, 7
    %v222 = vsub.s32 %v219, %v221
    %v223 = vrot.slane %v213, %v222
    %v225 = vunpack.c.l.s4 1966171168
    %v226 = vunpack.c.0.s8 %v225
    %v227 = vlaneseq
    %v228 = vshrl.u32 %v227, 7
    %v229 = vsub.s32 %v226, %v228
    %v230 = vrot.slane %v215, %v229
    %v232 = vunpack.c.l.s4 1966171168
    %v233 = vunpack.c.0.s8 %v232
    %v234 = vlaneseq
    %v235 = vshrl.u32 %v234, 7
    %v236 = vsub.s32 %v233, %v235
    %v237 = vrot.slane %v214, %v236
    %v239 = vunpack.c.l.s4 1966171168
    %v240 = vunpack.c.0.s8 %v239
    %v241 = vlaneseq
    %v242 = vshrl.u32 %v241, 7
    %v243 = vsub.s32 %v240, %v242
    %v244 = vrot.slane %v216, %v243
    %v245 = vcombine.high %v223, %v223
    %v246 = vcombine.high %v230, %v230
    %v247 = vcombine.high %v237, %v237
    %v248 = vcombine.high %v244, %v244
    %v385 = vunpack.c.l.b16 %v42
    %v386 = vunpack.c.l.b16 %v43
    %v387 = vunpack.c.l.b16 %v44
    %v388 = vunpack.c.l.b16 %v45
    %v389 = vunpack.c.l.b16 %v46
    %v390 = vunpack.c.l.b16 %v47
    %v391 = vunpack.c.l.b16 %v48
    %v392 = vunpack.c.l.b16 %v49
    %v393 = vunpack.c.l.b16 %v50
    %v394 = vunpack.c.l.b16 %v51
    %v395 = vunpack.c.l.b16 %v52
    %v396 = vunpack.c.l.b16 %v53
    %v397 = vunpack.c.l.b16 %v54
    %v398 = vunpack.c.l.b16 %v55
    %v399 = vunpack.c.l.b16 %v56
    %v400 = vunpack.c.l.b16 %v57
    %v401 = vunpack.c.l.b16 %v58
    %v402 = vunpack.c.l.b16 %v59
    %v403 = vunpack.c.l.b16 %v60
    %v404 = vunpack.c.l.b16 %v61
    %v405 = vunpack.c.l.b16 %v62
    %v406 = vunpack.c.l.b16 %v63
    %v407 = vunpack.c.l.b16 %v64
    %v408 = vunpack.c.l.b16 %v65
    %v409 = vunpack.c.l.b16 %v66
    %v410 = vunpack.c.l.b16 %v67
    %v411 = vunpack.c.l.b16 %v68
    %v412 = vunpack.c.l.b16 %v69
    %v413 = vunpack.c.l.b16 %v70
    %v414 = vunpack.c.l.b16 %v71
    %v415 = vunpack.c.l.b16 %v72
    %v416 = vunpack.c.l.b16 %v73
    %v417 = vunpack.c.l.b16 %v74
    %v418 = vunpack.c.l.b16 %v75
    %v419 = vunpack.c.l.b16 %v76
    %v420 = vunpack.c.l.b16 %v77
    %v421 = vunpack.c.l.b16 %v78
    %v422 = vunpack.c.l.b16 %v79
    %v423 = vunpack.c.l.b16 %v80
    %v424 = vunpack.c.l.b16 %v81
    %v425 = vunpack.c.l.b16 %v82
    %v426 = vunpack.c.l.b16 %v83
    %v427 = vunpack.c.l.b16 %v84
    %v428 = vunpack.c.l.b16 %v85
    %v429 = vunpack.c.l.b16 %v86
    %v430 = vunpack.c.l.b16 %v87
    %v431 = vunpack.c.l.b16 %v88
    %v432 = vunpack.c.l.b16 %v89
    %v433 = vunpack.c.l.b16 %v90
    %v434 = vunpack.c.l.b16 %v91
    %v435 = vunpack.c.l.b16 %v92
    %v436 = vunpack.c.l.b16 %v93
    %v437 = vunpack.c.l.b16 %v94
    %v438 = vunpack.c.l.b16 %v95
    %v439 = vunpack.c.l.b16 %v96
    %v440 = vunpack.c.l.b16 %v97
    %v441 = vunpack.c.l.b16 %v98
    %v442 = vunpack.c.l.b16 %v99
    %v443 = vunpack.c.l.b16 %v100
    %v444 = vunpack.c.l.b16 %v101
    %v445 = vunpack.c.l.b16 %v102
    %v446 = vunpack.c.l.b16 %v103
    %v447 = vunpack.c.l.b16 %v104
    %v448 = vunpack.c.l.b16 %v105
    %v449 = vunpack.c.l.b16 %v106
    %v450 = vunpack.c.l.b16 %v107
    %v451 = vunpack.c.l.b16 %v108
    %v452 = vunpack.c.l.b16 %v109
    %v453 = vunpack.c.l.b16 %v110
    %v454 = vunpack.c.l.b16 %v111
    %v455 = vunpack.c.l.b16 %v112
    %v456 = vunpack.c.l.b16 %v113
    %v457 = vunpack.c.l.b16 %v114
    %v458 = vunpack.c.l.b16 %v115
    %v459 = vunpack.c.l.b16 %v116
    %v460 = vunpack.c.l.b16 %v117
    %v461 = vunpack.c.l.b16 %v118
    %v462 = vunpack.c.l.b16 %v119
    %v463 = vunpack.c.l.b16 %v120
    %v464 = vunpack.c.l.b16 %v121
    %v465 = vunpack.c.l.b16 %v122
    %v466 = vunpack.c.l.b16 %v123
    %v467 = vunpack.c.l.b16 %v124
    %v468 = vunpack.c.l.b16 %v125
    %v469 = vunpack.c.l.b16 %v126
    %v470 = vunpack.c.l.b16 %v127
    %v471 = vunpack.c.l.b16 %v128
    %v472 = vunpack.c.l.b16 %v129
    %v473 = vunpack.c.l.b16 %v130
    %v474 = vunpack.c.l.b16 %v131
    %v475 = vunpack.c.l.b16 %v132
    %v476 = vunpack.c.l.b16 %v133
    %v477 = vunpack.c.l.b16 %v134
    %v478 = vunpack.c.l.b16 %v135
    %v479 = vunpack.c.l.b16 %v136
    %v480 = vunpack.c.l.b16 %v137
    %v481 = vunpack.c.l.b16 %v138
    %v482 = vunpack.c.l.b16 %v139
    %v483 = vunpack.c.l.b16 %v140
    %v484 = vunpack.c.l.b16 %v141
    %v485 = vunpack.c.l.b16 %v142
    %v486 = vunpack.c.l.b16 %v143
    %v487 = vunpack.c.l.b16 %v144
    %v488 = vunpack.c.l.b16 %v145
    %v489 = vunpack.c.l.b16 %v146
    %v490 = vunpack.c.l.b16 %v147
    %v491 = vunpack.c.l.b16 %v148
    %v492 = vunpack.c.l.b16 %v149
    %v493 = vunpack.c.l.b16 %v150
    %v494 = vunpack.c.l.b16 %v151
    %v495 = vunpack.c.l.b16 %v152
    %v496 = vunpack.c.l.b16 %v153
    %v497 = vunpack.c.l.b16 %v154
    %v498 = vunpack.c.l.b16 %v155
    %v499 = vunpack.c.l.b16 %v156
    %v500 = vunpack.c.l.b16 %v157
    %v501 = vunpack.c.l.b16 %v158
    %v502 = vunpack.c.l.b16 %v159
    %v503 = vunpack.c.l.b16 %v160
    %v504 = vunpack.c.l.b16 %v161
    %v505 = vunpack.c.l.b16 %v162
    %v506 = vunpack.c.l.b16 %v163
    %v507 = vunpack.c.l.b16 %v164
    %v508 = vunpack.c.l.b16 %v165
    %v509 = vunpack.c.l.b16 %v166
    %v510 = vunpack.c.l.b16 %v167
    %v511 = vunpack.c.l.b16 %v168
    %v512 = vunpack.c.l.b16 %v169
    %v513 = vpack.c.b16 %v386, %v385
    %v514 = vpack.c.b16 %v388, %v387
    %v515 = vpack.c.b16 %v390, %v389
    %v516 = vpack.c.b16 %v392, %v391
    %v517 = vpack.c.b16 %v394, %v393
    %v518 = vpack.c.b16 %v396, %v395
    %v519 = vpack.c.b16 %v398, %v397
    %v520 = vpack.c.b16 %v400, %v399
    %v521 = vpack.c.b16 %v402, %v401
    %v522 = vpack.c.b16 %v404, %v403
    %v523 = vpack.c.b16 %v406, %v405
    %v524 = vpack.c.b16 %v408, %v407
    %v525 = vpack.c.b16 %v410, %v409
    %v526 = vpack.c.b16 %v412, %v411
    %v527 = vpack.c.b16 %v414, %v413
    %v528 = vpack.c.b16 %v416, %v415
    %v529 = vpack.c.b16 %v418, %v417
    %v530 = vpack.c.b16 %v420, %v419
    %v531 = vpack.c.b16 %v422, %v421
    %v532 = vpack.c.b16 %v424, %v423
    %v533 = vpack.c.b16 %v426, %v425
    %v534 = vpack.c.b16 %v428, %v427
    %v535 = vpack.c.b16 %v430, %v429
    %v536 = vpack.c.b16 %v432, %v431
    %v537 = vpack.c.b16 %v434, %v433
    %v538 = vpack.c.b16 %v436, %v435
    %v539 = vpack.c.b16 %v438, %v437
    %v540 = vpack.c.b16 %v440, %v439
    %v541 = vpack.c.b16 %v442, %v441
    %v542 = vpack.c.b16 %v444, %v443
    %v543 = vpack.c.b16 %v446, %v445
    %v544 = vpack.c.b16 %v448, %v447
    %v545 = vpack.c.b16 %v450, %v449
    %v546 = vpack.c.b16 %v452, %v451
    %v547 = vpack.c.b16 %v454, %v453
    %v548 = vpack.c.b16 %v456, %v455
    %v549 = vpack.c.b16 %v458, %v457
    %v550 = vpack.c.b16 %v460, %v459
    %v551 = vpack.c.b16 %v462, %v461
    %v552 = vpack.c.b16 %v464, %v463
    %v553 = vpack.c.b16 %v466, %v465
    %v554 = vpack.c.b16 %v468, %v467
    %v555 = vpack.c.b16 %v470, %v469
    %v556 = vpack.c.b16 %v472, %v471
    %v557 = vpack.c.b16 %v474, %v473
    %v558 = vpack.c.b16 %v476, %v475
    %v559 = vpack.c.b16 %v478, %v477
    %v560 = vpack.c.b16 %v480, %v479
    %v561 = vpack.c.b16 %v482, %v481
    %v562 = vpack.c.b16 %v484, %v483
    %v563 = vpack.c.b16 %v486, %v485
    %v564 = vpack.c.b16 %v488, %v487
    %v565 = vpack.c.b16 %v490, %v489
    %v566 = vpack.c.b16 %v492, %v491
    %v567 = vpack.c.b16 %v494, %v493
    %v568 = vpack.c.b16 %v496, %v495
    %v569 = vpack.c.b16 %v498, %v497
    %v570 = vpack.c.b16 %v500, %v499
    %v571 = vpack.c.b16 %v502, %v501
    %v572 = vpack.c.b16 %v504, %v503
    %v573 = vpack.c.b16 %v506, %v505
    %v574 = vpack.c.b16 %v508, %v507
    %v575 = vpack.c.b16 %v510, %v509
    %v576 = vpack.c.b16 %v512, %v511
    %641 = vmatprep.subr.bf16.mxu0 0
    %642 = vmatpush1.bf16.msra.mxu0 %v513
    %643 = vmatprep.subr.bf16.mxu0 0
    %644 = vmatpush1.bf16.msra.mxu0 %v514
    %645 = vmatprep.subr.bf16.mxu0 0
    %646 = vmatpush1.bf16.msra.mxu0 %v515
    %647 = vmatprep.subr.bf16.mxu0 0
    %648 = vmatpush1.bf16.msra.mxu0 %v516
    %649 = vmatprep.subr.bf16.mxu0 0
    %650 = vmatpush1.bf16.msra.mxu0 %v517
    %651 = vmatprep.subr.bf16.mxu0 0
    %652 = vmatpush1.bf16.msra.mxu0 %v518
    %653 = vmatprep.subr.bf16.mxu0 0
    %654 = vmatpush1.bf16.msra.mxu0 %v519
    %655 = vmatprep.subr.bf16.mxu0 0
    %656 = vmatpush1.bf16.msra.mxu0 %v520
    %657 = vmatprep.subr.bf16.mxu0 0
    %658 = vmatpush1.bf16.msra.mxu0 %v521
    %659 = vmatprep.subr.bf16.mxu0 0
    %660 = vmatpush1.bf16.msra.mxu0 %v522
    %661 = vmatprep.subr.bf16.mxu0 0
    %662 = vmatpush1.bf16.msra.mxu0 %v523
    %663 = vmatprep.subr.bf16.mxu0 0
    %664 = vmatpush1.bf16.msra.mxu0 %v524
    %665 = vmatprep.subr.bf16.mxu0 0
    %666 = vmatpush1.bf16.msra.mxu0 %v525
    %667 = vmatprep.subr.bf16.mxu0 0
    %668 = vmatpush1.bf16.msra.mxu0 %v526
    %669 = vmatprep.subr.bf16.mxu0 0
    %670 = vmatpush1.bf16.msra.mxu0 %v527
    %671 = vmatprep.subr.bf16.mxu0 0
    %672 = vmatpush1.bf16.msra.mxu0 %v528
    %673 = vmatprep.mubr.bf16.mxu0 %v237
    %674 = vmatmul.mubr.bf16.gmra.mrb[0].mxu0 %v223
    %v675 = vpop.f32.mrb[0].mxu0
    %v676 = vadd.f32 %v175, %v675
    %v677 = vpop.f32.mrb[0].mxu0
    %v678 = vpop.f32.mrb[0].mxu0
    %v679 = vpop.f32.mrb[0].mxu0
    %680 = vdwg.mxu0
    %681 = vmatprep.subr.bf16.mxu0 0
    %682 = vmatpush1.bf16.msra.mxu0 %v529
    %683 = vmatprep.subr.bf16.mxu0 0
    %684 = vmatpush1.bf16.msra.mxu0 %v530
    %685 = vmatprep.subr.bf16.mxu0 0
    %686 = vmatpush1.bf16.msra.mxu0 %v531
    %687 = vmatprep.subr.bf16.mxu0 0
    %688 = vmatpush1.bf16.msra.mxu0 %v532
    %689 = vmatprep.subr.bf16.mxu0 0
    %690 = vmatpush1.bf16.msra.mxu0 %v533
    %691 = vmatprep.subr.bf16.mxu0 0
    %692 = vmatpush1.bf16.msra.mxu0 %v534
    %693 = vmatprep.subr.bf16.mxu0 0
    %694 = vmatpush1.bf16.msra.mxu0 %v535
    %695 = vmatprep.subr.bf16.mxu0 0
    %696 = vmatpush1.bf16.msra.mxu0 %v536
    %697 = vmatprep.subr.bf16.mxu0 0
    %698 = vmatpush1.bf16.msra.mxu0 %v537
    %699 = vmatprep.subr.bf16.mxu0 0
    %700 = vmatpush1.bf16.msra.mxu0 %v538
    %701 = vmatprep.subr.bf16.mxu0 0
    %702 = vmatpush1.bf16.msra.mxu0 %v539
    %703 = vmatprep.subr.bf16.mxu0 0
    %704 = vmatpush1.bf16.msra.mxu0 %v540
    %705 = vmatprep.subr.bf16.mxu0 0
    %706 = vmatpush1.bf16.msra.mxu0 %v541
    %707 = vmatprep.subr.bf16.mxu0 0
    %708 = vmatpush1.bf16.msra.mxu0 %v542
    %709 = vmatprep.subr.bf16.mxu0 0
    %710 = vmatpush1.bf16.msra.mxu0 %v543
    %711 = vmatprep.subr.bf16.mxu0 0
    %712 = vmatpush1.bf16.msra.mxu0 %v544
    %713 = vmatprep.mubr.bf16.mxu0 %v247
    %714 = vmatmul.mubr.bf16.gmra.mrb[0].mxu0 %v245
    %v715 = vpop.f32.mrb[0].mxu0
    %v716 = vadd.f32 %v676, %v715
    %v717 = vpop.f32.mrb[0].mxu0
    %v718 = vpop.f32.mrb[0].mxu0
    %v719 = vpop.f32.mrb[0].mxu0
    %720 = vdwg.mxu0
    %721 = vmatprep.subr.bf16.mxu0 0
    %722 = vmatpush1.bf16.msra.mxu0 %v545
    %723 = vmatprep.subr.bf16.mxu0 0
    %724 = vmatpush1.bf16.msra.mxu0 %v546
    %725 = vmatprep.subr.bf16.mxu0 0
    %726 = vmatpush1.bf16.msra.mxu0 %v547
    %727 = vmatprep.subr.bf16.mxu0 0
    %728 = vmatpush1.bf16.msra.mxu0 %v548
    %729 = vmatprep.subr.bf16.mxu0 0
    %730 = vmatpush1.bf16.msra.mxu0 %v549
    %731 = vmatprep.subr.bf16.mxu0 0
    %732 = vmatpush1.bf16.msra.mxu0 %v550
    %733 = vmatprep.subr.bf16.mxu0 0
    %734 = vmatpush1.bf16.msra.mxu0 %v551
    %735 = vmatprep.subr.bf16.mxu0 0
    %736 = vmatpush1.bf16.msra.mxu0 %v552
    %737 = vmatprep.subr.bf16.mxu0 0
    %738 = vmatpush1.bf16.msra.mxu0 %v553
    %739 = vmatprep.subr.bf16.mxu0 0
    %740 = vmatpush1.bf16.msra.mxu0 %v554
    %741 = vmatprep.subr.bf16.mxu0 0
    %742 = vmatpush1.bf16.msra.mxu0 %v555
    %743 = vmatprep.subr.bf16.mxu0 0
    %744 = vmatpush1.bf16.msra.mxu0 %v556
    %745 = vmatprep.subr.bf16.mxu0 0
    %746 = vmatpush1.bf16.msra.mxu0 %v557
    %747 = vmatprep.subr.bf16.mxu0 0
    %748 = vmatpush1.bf16.msra.mxu0 %v558
    %749 = vmatprep.subr.bf16.mxu0 0
    %750 = vmatpush1.bf16.msra.mxu0 %v559
    %751 = vmatprep.subr.bf16.mxu0 0
    %752 = vmatpush1.bf16.msra.mxu0 %v560
    %753 = vmatprep.mubr.bf16.mxu0 %v244
    %754 = vmatmul.mubr.bf16.gmra.mrb[0].mxu0 %v230
    %v755 = vpop.f32.mrb[0].mxu0
    %v756 = vadd.f32 %v716, %v755
    %v757 = vpop.f32.mrb[0].mxu0
    %v758 = vpop.f32.mrb[0].mxu0
    %v759 = vpop.f32.mrb[0].mxu0
    %760 = vdwg.mxu0
    %761 = vmatprep.subr.bf16.mxu0 0
    %762 = vmatpush1.bf16.msra.mxu0 %v561
    %763 = vmatprep.subr.bf16.mxu0 0
    %764 = vmatpush1.bf16.msra.mxu0 %v562
    %765 = vmatprep.subr.bf16.mxu0 0
    %766 = vmatpush1.bf16.msra.mxu0 %v563
    %767 = vmatprep.subr.bf16.mxu0 0
    %768 = vmatpush1.bf16.msra.mxu0 %v564
    %769 = vmatprep.subr.bf16.mxu0 0
    %770 = vmatpush1.bf16.msra.mxu0 %v565
    %771 = vmatprep.subr.bf16.mxu0 0
    %772 = vmatpush1.bf16.msra.mxu0 %v566
    %773 = vmatprep.subr.bf16.mxu0 0
    %774 = vmatpush1.bf16.msra.mxu0 %v567
    %775 = vmatprep.subr.bf16.mxu0 0
    %776 = vmatpush1.bf16.msra.mxu0 %v568
    %777 = vmatprep.subr.bf16.mxu0 0
    %778 = vmatpush1.bf16.msra.mxu0 %v569
    %779 = vmatprep.subr.bf16.mxu0 0
    %780 = vmatpush1.bf16.msra.mxu0 %v570
    %781 = vmatprep.subr.bf16.mxu0 0
    %782 = vmatpush1.bf16.msra.mxu0 %v571
    %783 = vmatprep.subr.bf16.mxu0 0
    %784 = vmatpush1.bf16.msra.mxu0 %v572
    %785 = vmatprep.subr.bf16.mxu0 0
    %786 = vmatpush1.bf16.msra.mxu0 %v573
    %787 = vmatprep.subr.bf16.mxu0 0
    %788 = vmatpush1.bf16.msra.mxu0 %v574
    %789 = vmatprep.subr.bf16.mxu0 0
    %790 = vmatpush1.bf16.msra.mxu0 %v575
    %791 = vmatprep.subr.bf16.mxu0 0
    %792 = vmatpush1.bf16.msra.mxu0 %v576
    %793 = vmatprep.mubr.bf16.mxu0 %v248
    %794 = vmatmul.mubr.bf16.gmra.mrb[0].mxu0 %v246
    %v795 = vpop.f32.mrb[0].mxu0
    %v796 = vadd.f32 %v756, %v795
    %v797 = vpop.f32.mrb[0].mxu0
    %v798 = vpop.f32.mrb[0].mxu0
    %v799 = vpop.f32.mrb[0].mxu0
    %800 = vdwg.mxu0
    %v801 = vstv %s37
    %v802 = vmul.f32 %v796, %v801
    %803 = vst [vmem:[#allocation6] sm:$0xff] %v802
    // Predicated region
    $region22: #{model_with_temperature_forward.1} parent=1 // pred_check
      _
    $region23: #{model_with_temperature_forward.1} parent=1 // pred_check_branch
      %805 = sbr.rel (0) target = $region25
    $region24: #{model_with_temperature_forward.1} parent=1 // pred_region
      %s807 = ssub.s32 128, 32
      %808 = vsyncadd [#allocation5], %s807
      %s809 = sshll.u32 [#allocation6], 4
      %s810 = int_to_ptr.vmem [resolvable:$true] %s809
      %815 = dma.vmem_to_hbm [thread:$0]  %s810, 32, %s4, [#allocation5], 32, 32, 2
    $region25: #{model_with_temperature_forward.1} parent=1 // pred_fallthru
      _
    // Predicated region
    $region26: #{model_with_temperature_forward.1} parent=1 // pred_check
      _
    $region27: #{model_with_temperature_forward.1} parent=1 // pred_check_branch
      %817 = sbr.rel (0) target = $region29
    $region28: #{model_with_temperature_forward.1} parent=1 // pred_region
      %818 = dma.done [#allocation5], 128
    $region29: #{model_with_temperature_forward.1} parent=1 // pred_fallthru
      _
    %819 = vsyncpa [#allocation4], 1
    %820 = vsyncpa [#allocation5], 1

</llo_original>
